<compile_context>
chip_gen: v7x
topology: tpu7x:2x2x1
jax: 0.10.0
libtpu: 0.0.40
codegen_flags: <defaults>
</compile_context>

<pallas_src>
import jax
import jax.numpy as jnp
from jax.experimental import pallas as pl
from jax.experimental.pallas import tpu as pltpu


def _round_up(x, m):
    return (x + m - 1) // m * m


def _actor_kernel(ma_ref,
                  x_ref,
                  w1_ref, b1_ref,
                  w2_ref, b2_ref,
                  w22_ref, b22_ref,
                  w3_ref, b3_ref,
                  o_ref):
    ma = ma_ref[0, 0]  # f32 scalar from SMEM

    # layer 1: (TB, S) @ (S, 256) -> relu      (bf16 MXU inputs, f32 accumulate)
    a = jnp.dot(x_ref[...].astype(jnp.bfloat16), w1_ref[...],
                preferred_element_type=jnp.float32)
    a = jnp.maximum(a + b1_ref[...], 0.0)

    # layer 2: (TB, 256) @ (256, 256) -> relu
    a = jnp.dot(a.astype(jnp.bfloat16), w2_ref[...],
                preferred_element_type=jnp.float32)
    a = jnp.maximum(a + b2_ref[...], 0.0)

    # layer 2_2: (TB, 256) @ (256, 256) -> relu
    a = jnp.dot(a.astype(jnp.bfloat16), w22_ref[...],
                preferred_element_type=jnp.float32)
    a = jnp.maximum(a + b22_ref[...], 0.0)

    # layer 3: (TB, 256) @ (256, A) -> max_action * tanh
    a = jnp.dot(a.astype(jnp.bfloat16), w3_ref[...],
                preferred_element_type=jnp.float32)
    o_ref[...] = ma * jnp.tanh(a + b3_ref[...])


def actor_forward(state, params, max_action, *, batch_tile=2048):
    """Fused Actor forward.

    state: (B, state_dim) f32.
    params: (w1,b1,w2,b2,w22,b22,w3,b3) with weights bf16 (in,out) and
            biases f32 (1,out).
    Returns (B, action_dim) f32.
    """
    w1, b1, w2, b2, w22, b22, w3, b3 = params
    B, state_dim = state.shape
    hidden = w1.shape[1]
    action_dim = w3.shape[1]

    # Batch tiling.
    if B <= 256:
        # Tiny batch: single sublane-aligned tile; the call is weight-DMA /
        # launch-latency bound anyway, so tile shape is irrelevant here.
        tb = _round_up(max(B, 8), 8)
    else:
        # Large batch: big tiles (fewer grid steps), but always >= 2 grid
        # steps so both v7x TensorCores get work via the parallel axis.
        # Multiple of 256 rows maps cleanly onto the v6e/v7x 256x256 MXU
        # (and is 128-aligned for v5e's 4x128x128 MXU).
        tb = min(batch_tile, _round_up(pl.cdiv(B, 2), 256))

    b_pad = _round_up(B, tb)
    if b_pad != B:
        state = jnp.pad(state, ((0, b_pad - B), (0, 0)))
    grid = (b_pad // tb,)

    ma = jnp.asarray(max_action, jnp.float32).reshape(1, 1)

    # Weights / biases: constant block index -> resident in VMEM, DMA'd once.
    resident = lambda shape: pl.BlockSpec(shape, lambda i: (0, 0))

    out = pl.pallas_call(
        _actor_kernel,
        out_shape=jax.ShapeDtypeStruct((b_pad, action_dim), jnp.float32),
        grid=grid,
        in_specs=[
            pl.BlockSpec(memory_space=pltpu.MemorySpace.SMEM),   # max_action
            pl.BlockSpec((tb, state_dim), lambda i: (i, 0)),     # state tile
            resident((state_dim, hidden)), resident((1, hidden)),
            resident((hidden, hidden)), resident((1, hidden)),
            resident((hidden, hidden)), resident((1, hidden)),
            resident((hidden, action_dim)), resident((1, action_dim)),
        ],
        # Unpadded output: last block dim equals the full array dim, so no
        # 16x-inflated lane padding and no post-kernel column slice.
        out_specs=pl.BlockSpec((tb, action_dim), lambda i: (i, 0)),
        compiler_params=pltpu.CompilerParams(
            dimension_semantics=("parallel",)),
    )(ma, state, w1, b1, w2, b2, w22, b22, w3, b3)

    if b_pad != B:
        out = out[:B]
    return out


def init_actor_params(key, state_dim, action_dim, hidden=256):
    """Deterministic synthetic init (PyTorch-Linear-style uniform fan-in), f32."""
    ks = jax.random.split(key, 8)

    def lin(kw, kb, fan_in, fan_out):
        bound = 1.0 / jnp.sqrt(jnp.float32(fan_in))
        w = jax.random.uniform(kw, (fan_in, fan_out), jnp.float32, -bound, bound)
        b = jax.random.uniform(kb, (1, fan_out), jnp.float32, -bound, bound)
        return w, b

    w1, b1 = lin(ks[0], ks[1], state_dim, hidden)
    w2, b2 = lin(ks[2], ks[3], hidden, hidden)
    w22, b22 = lin(ks[4], ks[5], hidden, hidden)
    w3, b3 = lin(ks[6], ks[7], hidden, action_dim)
    return (w1, b1, w2, b2, w22, b22, w3, b3)


def cast_params_for_kernel(params):
    """One-time param prep: weights -> bf16 (halves HBM weight traffic), biases f32."""
    w1, b1, w2, b2, w22, b22, w3, b3 = params
    bf = lambda w: w.astype(jnp.bfloat16)
    return (bf(w1), b1, bf(w2), b2, bf(w22), b22, bf(w3), b3)


def actor_ref_f32(state, params, max_action):
    """Full-f32 pure-JAX reference (matches the PyTorch module numerics)."""
    w1, b1, w2, b2, w22, b22, w3, b3 = params
    a = jax.nn.relu(state @ w1 + b1)
    a = jax.nn.relu(a @ w2 + b2)
    a = jax.nn.relu(a @ w22 + b22)
    return max_action * jnp.tanh(a @ w3 + b3)


def actor_ref_bf16(state, params, max_action):
    """Pure-JAX reference mirroring the kernel's bf16-input / f32-acc math."""
    w1, b1, w2, b2, w22, b22, w3, b3 = params  # weights already bf16

    def lin(a, w, b):
        return jnp.dot(a.astype(jnp.bfloat16), w,
                       preferred_element_type=jnp.float32) + b

    a = jax.nn.relu(lin(state, w1, b1))
    a = jax.nn.relu(lin(a, w2, b2))
    a = jax.nn.relu(lin(a, w22, b22))
    return max_action * jnp.tanh(lin(a, w3, b3))


def _check(state, params_k, params_f32, max_action):
    out = jax.block_until_ready(actor_forward(state, params_k, max_action))
    assert out.shape == (state.shape[0], params_f32[-1].shape[1])

    # Exact-math check vs a reference doing the same bf16-input / f32-acc ops.
    ref_bf16 = actor_ref_bf16(state, params_k, max_action)
    assert jnp.allclose(out, ref_bf16, atol=2e-3, rtol=2e-3), \
        "mismatch vs bf16-matched JAX reference"

    # Loose sanity check vs the full-f32 (PyTorch-equivalent) reference.
    ref_f32 = actor_ref_f32(state, params_f32, max_action)
    assert jnp.allclose(out, ref_f32, atol=5e-2, rtol=5e-2), \
        "mismatch vs f32 JAX reference beyond bf16 tolerance"
    return out


if __name__ == "__main__":
    key = jax.random.PRNGKey(0)
    k_state, k_state2, k_params = jax.random.split(key, 3)

    state_dim = 32
    action_dim = 8
    max_action = 1.0

    params_f32 = init_actor_params(k_params, state_dim, action_dim)
    params_k = cast_params_for_kernel(params_f32)

    # Small-batch (rollout-style) path: single tile.
    state_small = jax.random.normal(k_state, (8, state_dim), jnp.float32)
    _check(state_small, params_k, params_f32, max_action)

    # Multi-tile path: exercises >=2 grid steps + batch padding + row slice.
    state_big = jax.random.normal(k_state2, (300, state_dim), jnp.float32)
    _check(state_big, params_k, params_f32, max_action)

    print("KERNEL_OK")
</pallas_src>

<mosaic_0001>
module attributes {stable_mosaic.version = 11 : i64} {
  func.func @_actor_kernel(%arg0: i32, %arg1: memref<1x1xf32, #tpu.memory_space<smem>>, %arg2: memref<8x32xf32, #tpu.memory_space<vmem>>, %arg3: memref<32x256xbf16, #tpu.memory_space<vmem>>, %arg4: memref<1x256xf32, #tpu.memory_space<vmem>>, %arg5: memref<256x256xbf16, #tpu.memory_space<vmem>>, %arg6: memref<1x256xf32, #tpu.memory_space<vmem>>, %arg7: memref<256x256xbf16, #tpu.memory_space<vmem>>, %arg8: memref<1x256xf32, #tpu.memory_space<vmem>>, %arg9: memref<256x8xbf16, #tpu.memory_space<vmem>>, %arg10: memref<1x8xf32, #tpu.memory_space<vmem>>, %arg11: memref<8x8xf32, #tpu.memory_space<vmem>>) attributes {dimension_semantics = [#tpu.dimension_semantics<parallel>], iteration_bounds = array<i64: 1>, scalar_prefetch = 0 : i64, scratch_operands = 0 : i64, tpu.core_type = #tpu.core_type<tc>, window_params = [{transform_indices = @transform_0, window_bounds = array<i64: 1, 1>}, {transform_indices = @transform_1, window_bounds = array<i64: 8, 32>}, {pipeline_mode = #tpu.pipeline_mode<synchronous>, transform_indices = @transform_2, window_bounds = array<i64: 32, 256>}, {pipeline_mode = #tpu.pipeline_mode<synchronous>, transform_indices = @transform_3, window_bounds = array<i64: 1, 256>}, {pipeline_mode = #tpu.pipeline_mode<synchronous>, transform_indices = @transform_4, window_bounds = array<i64: 256, 256>}, {pipeline_mode = #tpu.pipeline_mode<synchronous>, transform_indices = @transform_5, window_bounds = array<i64: 1, 256>}, {pipeline_mode = #tpu.pipeline_mode<synchronous>, transform_indices = @transform_6, window_bounds = array<i64: 256, 256>}, {pipeline_mode = #tpu.pipeline_mode<synchronous>, transform_indices = @transform_7, window_bounds = array<i64: 1, 256>}, {pipeline_mode = #tpu.pipeline_mode<synchronous>, transform_indices = @transform_8, window_bounds = array<i64: 256, 8>}, {pipeline_mode = #tpu.pipeline_mode<synchronous>, transform_indices = @transform_9, window_bounds = array<i64: 1, 8>}, {transform_indices = @transform_10, window_bounds = array<i64: 8, 8>}]} {
    %c0 = arith.constant 0 : index
    %c0_0 = arith.constant 0 : index
    %0 = memref.load %arg1[%c0, %c0_0] : memref<1x1xf32, #tpu.memory_space<smem>>
    %c0_1 = arith.constant 0 : index
    %c0_2 = arith.constant 0 : index
    %1 = vector.load %arg2[%c0_1, %c0_2] : memref<8x32xf32, #tpu.memory_space<vmem>>, vector<8x32xf32>
    %2 = arith.truncf %1 : vector<8x32xf32> to vector<8x32xbf16>
    %c0_3 = arith.constant 0 : index
    %c0_4 = arith.constant 0 : index
    %3 = vector.load %arg3[%c0_3, %c0_4] : memref<32x256xbf16, #tpu.memory_space<vmem>>, vector<32x256xbf16>
    %cst = arith.constant dense<0.000000e+00> : vector<8x256xf32>
    %4 = tpu.matmul %2, %3, %cst {dimension_numbers = #tpu.dot_dimension_numbers<[1], [0], [0], [1], [0, 0, 1, 1], [], []>} : vector<8x32xbf16>, vector<32x256xbf16>, vector<8x256xf32> -> vector<8x256xf32>
    %c0_5 = arith.constant 0 : index
    %c0_6 = arith.constant 0 : index
    %5 = vector.load %arg4[%c0_5, %c0_6] : memref<1x256xf32, #tpu.memory_space<vmem>>, vector<1x256xf32>
    %6 = vector.broadcast %5 : vector<1x256xf32> to vector<8x256xf32>
    %7 = arith.addf %4, %6 : vector<8x256xf32>
    %cst_7 = arith.constant 0.000000e+00 : f32
    %8 = vector.broadcast %cst_7 : f32 to vector<8x256xf32>
    %9 = arith.maximumf %7, %8 : vector<8x256xf32>
    %10 = arith.truncf %9 : vector<8x256xf32> to vector<8x256xbf16>
    %c0_8 = arith.constant 0 : index
    %c0_9 = arith.constant 0 : index
    %11 = vector.load %arg5[%c0_8, %c0_9] : memref<256x256xbf16, #tpu.memory_space<vmem>>, vector<256x256xbf16>
    %cst_10 = arith.constant dense<0.000000e+00> : vector<8x256xf32>
    %12 = tpu.matmul %10, %11, %cst_10 {dimension_numbers = #tpu.dot_dimension_numbers<[1], [0], [0], [1], [0, 0, 1, 1], [], []>} : vector<8x256xbf16>, vector<256x256xbf16>, vector<8x256xf32> -> vector<8x256xf32>
    %c0_11 = arith.constant 0 : index
    %c0_12 = arith.constant 0 : index
    %13 = vector.load %arg6[%c0_11, %c0_12] : memref<1x256xf32, #tpu.memory_space<vmem>>, vector<1x256xf32>
    %14 = vector.broadcast %13 : vector<1x256xf32> to vector<8x256xf32>
    %15 = arith.addf %12, %14 : vector<8x256xf32>
    %cst_13 = arith.constant 0.000000e+00 : f32
    %16 = vector.broadcast %cst_13 : f32 to vector<8x256xf32>
    %17 = arith.maximumf %15, %16 : vector<8x256xf32>
    %18 = arith.truncf %17 : vector<8x256xf32> to vector<8x256xbf16>
    %c0_14 = arith.constant 0 : index
    %c0_15 = arith.constant 0 : index
    %19 = vector.load %arg7[%c0_14, %c0_15] : memref<256x256xbf16, #tpu.memory_space<vmem>>, vector<256x256xbf16>
    %cst_16 = arith.constant dense<0.000000e+00> : vector<8x256xf32>
    %20 = tpu.matmul %18, %19, %cst_16 {dimension_numbers = #tpu.dot_dimension_numbers<[1], [0], [0], [1], [0, 0, 1, 1], [], []>} : vector<8x256xbf16>, vector<256x256xbf16>, vector<8x256xf32> -> vector<8x256xf32>
    %c0_17 = arith.constant 0 : index
    %c0_18 = arith.constant 0 : index
    %21 = vector.load %arg8[%c0_17, %c0_18] : memref<1x256xf32, #tpu.memory_space<vmem>>, vector<1x256xf32>
    %22 = vector.broadcast %21 : vector<1x256xf32> to vector<8x256xf32>
    %23 = arith.addf %20, %22 : vector<8x256xf32>
    %cst_19 = arith.constant 0.000000e+00 : f32
    %24 = vector.broadcast %cst_19 : f32 to vector<8x256xf32>
    %25 = arith.maximumf %23, %24 : vector<8x256xf32>
    %26 = arith.truncf %25 : vector<8x256xf32> to vector<8x256xbf16>
    %c0_20 = arith.constant 0 : index
    %c0_21 = arith.constant 0 : index
    %27 = vector.load %arg9[%c0_20, %c0_21] : memref<256x8xbf16, #tpu.memory_space<vmem>>, vector<256x8xbf16>
    %cst_22 = arith.constant dense<0.000000e+00> : vector<8x8xf32>
    %28 = tpu.matmul %26, %27, %cst_22 {dimension_numbers = #tpu.dot_dimension_numbers<[1], [0], [0], [1], [0, 0, 1, 1], [], []>} : vector<8x256xbf16>, vector<256x8xbf16>, vector<8x8xf32> -> vector<8x8xf32>
    %c0_23 = arith.constant 0 : index
    %c0_24 = arith.constant 0 : index
    %29 = vector.load %arg10[%c0_23, %c0_24] : memref<1x8xf32, #tpu.memory_space<vmem>>, vector<1x8xf32>
    %30 = vector.broadcast %29 : vector<1x8xf32> to vector<8x8xf32>
    %31 = arith.addf %28, %30 : vector<8x8xf32>
    %32 = math.tanh %31 : vector<8x8xf32>
    %33 = vector.broadcast %0 : f32 to vector<8x8xf32>
    %34 = arith.mulf %33, %32 : vector<8x8xf32>
    %c0_25 = arith.constant 0 : index
    %c0_26 = arith.constant 0 : index
    %35 = vector.load %arg11[%c0_25, %c0_26] : memref<8x8xf32, #tpu.memory_space<vmem>>, vector<8x8xf32>
    tpu.vector_store %arg11[%c0_25, %c0_26], %34 {strides = array<i32>} : memref<8x8xf32, #tpu.memory_space<vmem>>, vector<8x8xf32>,
    return
  }
  func.func @transform_0(%arg0: i32) -> (i32, i32) {
    %c0_i32 = arith.constant 0 : i32
    %c0_i32_0 = arith.constant 0 : i32
    %c0_i32_1 = arith.constant 0 : i32
    return %c0_i32, %c0_i32_0 : i32, i32
  }
  func.func @transform_1(%arg0: i32) -> (i32, i32) {
    %c0_i32 = arith.constant 0 : i32
    %c0_i32_0 = arith.constant 0 : i32
    return %arg0, %c0_i32 : i32, i32
  }
  func.func @transform_2(%arg0: i32) -> (i32, i32) {
    %c0_i32 = arith.constant 0 : i32
    %c0_i32_0 = arith.constant 0 : i32
    %c0_i32_1 = arith.constant 0 : i32
    return %c0_i32, %c0_i32_0 : i32, i32
  }
  func.func @transform_3(%arg0: i32) -> (i32, i32) {
    %c0_i32 = arith.constant 0 : i32
    %c0_i32_0 = arith.constant 0 : i32
    %c0_i32_1 = arith.constant 0 : i32
    return %c0_i32, %c0_i32_0 : i32, i32
  }
  func.func @transform_4(%arg0: i32) -> (i32, i32) {
    %c0_i32 = arith.constant 0 : i32
    %c0_i32_0 = arith.constant 0 : i32
    %c0_i32_1 = arith.constant 0 : i32
    return %c0_i32, %c0_i32_0 : i32, i32
  }
  func.func @transform_5(%arg0: i32) -> (i32, i32) {
    %c0_i32 = arith.constant 0 : i32
    %c0_i32_0 = arith.constant 0 : i32
    %c0_i32_1 = arith.constant 0 : i32
    return %c0_i32, %c0_i32_0 : i32, i32
  }
  func.func @transform_6(%arg0: i32) -> (i32, i32) {
    %c0_i32 = arith.constant 0 : i32
    %c0_i32_0 = arith.constant 0 : i32
    %c0_i32_1 = arith.constant 0 : i32
    return %c0_i32, %c0_i32_0 : i32, i32
  }
  func.func @transform_7(%arg0: i32) -> (i32, i32) {
    %c0_i32 = arith.constant 0 : i32
    %c0_i32_0 = arith.constant 0 : i32
    %c0_i32_1 = arith.constant 0 : i32
    return %c0_i32, %c0_i32_0 : i32, i32
  }
  func.func @transform_8(%arg0: i32) -> (i32, i32) {
    %c0_i32 = arith.constant 0 : i32
    %c0_i32_0 = arith.constant 0 : i32
    %c0_i32_1 = arith.constant 0 : i32
    return %c0_i32, %c0_i32_0 : i32, i32
  }
  func.func @transform_9(%arg0: i32) -> (i32, i32) {
    %c0_i32 = arith.constant 0 : i32
    %c0_i32_0 = arith.constant 0 : i32
    %c0_i32_1 = arith.constant 0 : i32
    return %c0_i32, %c0_i32_0 : i32, i32
  }
  func.func @transform_10(%arg0: i32) -> (i32, i32) {
    %c0_i32 = arith.constant 0 : i32
    %c0_i32_0 = arith.constant 0 : i32
    return %arg0, %c0_i32 : i32, i32
  }
}

</mosaic_0001>

<llo_original>
// kernel: tpu_custom_call.1
$region0: #{tpu_custom_call.1}
  #allocation0 [shape = 'u32[]', space=smem, size = 0x4, offset = 0x4, fixed_abs, tag = 'smem constant byte address 0x4 - core index']
  #allocation1 [shape = 'u32[144,128]{1,0:T(1,128)}', space=vmem, size = 0x12000, scoped, tag = 'internal scratch']
  #allocation2 [shape = 'f32[1,1]{1,0:T(1,128)S(6)}', space=smem, size = 0x200, scoped, tag = 'scoped memory for tpu_custom_call.1']
  %s0 = inlined_call_operand.<no memory space> [shape: f32[1,1], index: 0, kind: input, shape index: {}]
  %s1 = inlined_call_operand.vmem [shape: f32[8,32], index: 1, kind: input, shape index: {}]
  %s2 = inlined_call_operand.vmem [shape: bf16[32,256], index: 2, kind: input, shape index: {}]
  %s3 = inlined_call_operand.vmem [shape: f32[1,256], index: 3, kind: input, shape index: {}]
  %s4 = inlined_call_operand.hbm [shape: bf16[256,256], index: 4, kind: input, shape index: {}]
  %s5 = inlined_call_operand.vmem [shape: f32[1,256], index: 5, kind: input, shape index: {}]
  %s6 = inlined_call_operand.hbm [shape: bf16[256,256], index: 6, kind: input, shape index: {}]
  %s7 = inlined_call_operand.vmem [shape: f32[1,256], index: 7, kind: input, shape index: {}]
  %s8 = inlined_call_operand.vmem [shape: bf16[256,8], index: 8, kind: input, shape index: {}]
  %s9 = inlined_call_operand.vmem [shape: f32[1,8], index: 9, kind: input, shape index: {}]
  %s10 = inlined_call_operand.hbm [shape: f32[8,8], index: 10, kind: output, shape index: {}]
  %s11 = sld [smem:[#allocation0]]
  $region58: #{tpu_custom_call.1} parent=0
    _
  %s13 = ssub.s32 1, %s11
  %s14 = scalar_select 0, %s13, %s11
  %15 = sst [smem:[#allocation2]] %s0
  $region1: #{tpu_custom_call.1} parent=0
    #allocation3 [shape = 'u8[131072]{0}', space=vmem, size = 0x20000, scoped, tag = 'input window, operand 4, single buffered']
    #allocation4 [shape = 's32[1]{0}', space=sflag, size = 0x4, scoped, tag = 'scoped memory for tpu_custom_call.1']
    #allocation5 [shape = 's32[1]{0}', space=sflag, size = 0x4, scoped, tag = 'scoped memory for tpu_custom_call.1']
    #allocation6 [shape = 'u8[131072]{0}', space=vmem, size = 0x20000, scoped, tag = 'input window, operand 6, single buffered']
    #allocation7 [shape = 's32[1]{0}', space=sflag, size = 0x4, scoped, tag = 'scoped memory for tpu_custom_call.1']
    #allocation8 [shape = 'u8[4096]{0}', space=vmem, size = 0x1000, scoped, tag = 'output window, operand 0, single buffered']
    %16 = vsyncpa [#allocation4], 0
    %17 = vsyncpa [#allocation7], 0
    %18 = vsyncpa [#allocation5], 0
    // Predicated region
    $region2: #{tpu_custom_call.1} parent=1 // pred_check
      _
    $region3: #{tpu_custom_call.1} parent=1 // pred_check_branch
      %20 = sbr.rel (0) target = $region5
    $region4: #{tpu_custom_call.1} parent=1 // pred_region
      _
    $region5: #{tpu_custom_call.1} parent=1 // pred_fallthru
      _
    // Predicated region
    $region6: #{tpu_custom_call.1} parent=1 // pred_check
      _
    $region7: #{tpu_custom_call.1} parent=1 // pred_check_branch
      %22 = sbr.rel (0) target = $region9
    $region8: #{tpu_custom_call.1} parent=1 // pred_region
      _
    $region9: #{tpu_custom_call.1} parent=1 // pred_fallthru
      _
    // Predicated region
    $region10: #{tpu_custom_call.1} parent=1 // pred_check
      _
    $region11: #{tpu_custom_call.1} parent=1 // pred_check_branch
      %24 = sbr.rel (0) target = $region13
    $region12: #{tpu_custom_call.1} parent=1 // pred_region
      _
    $region13: #{tpu_custom_call.1} parent=1 // pred_fallthru
      _
    // Predicated region
    $region14: #{tpu_custom_call.1} parent=1 // pred_check
      _
    $region15: #{tpu_custom_call.1} parent=1 // pred_check_branch
      %26 = sbr.rel (0) target = $region17
    $region16: #{tpu_custom_call.1} parent=1 // pred_region
      _
    $region17: #{tpu_custom_call.1} parent=1 // pred_fallthru
      _
    // Predicated region
    $region18: #{tpu_custom_call.1} parent=1 // pred_check
      _
    $region19: #{tpu_custom_call.1} parent=1 // pred_check_branch
      %28 = sbr.rel (0) target = $region21
    $region20: #{tpu_custom_call.1} parent=1 // pred_region
      %s30 = ssub.s32 4096, 4096
      %31 = vsyncadd [#allocation4], %s30
      %s32 = sshll.u32 [#allocation3], 4
      %s33 = int_to_ptr.vmem [resolvable:$true] %s32
      %38 = dma.hbm_to_vmem [thread:$0]  %s4, 4096, %s33, [#allocation4], 128, 128, 8
    $region21: #{tpu_custom_call.1} parent=1 // pred_fallthru
      _
    // Predicated region
    $region22: #{tpu_custom_call.1} parent=1 // pred_check
      _
    $region23: #{tpu_custom_call.1} parent=1 // pred_check_branch
      %40 = sbr.rel (0) target = $region25
    $region24: #{tpu_custom_call.1} parent=1 // pred_region
      _
    $region25: #{tpu_custom_call.1} parent=1 // pred_fallthru
      _
    // Predicated region
    $region26: #{tpu_custom_call.1} parent=1 // pred_check
      _
    $region27: #{tpu_custom_call.1} parent=1 // pred_check_branch
      %42 = sbr.rel (0) target = $region29
    $region28: #{tpu_custom_call.1} parent=1 // pred_region
      %s44 = ssub.s32 4096, 4096
      %45 = vsyncadd [#allocation7], %s44
      %s46 = sshll.u32 [#allocation6], 4
      %s47 = int_to_ptr.vmem [resolvable:$true] %s46
      %52 = dma.hbm_to_vmem [thread:$0]  %s6, 4096, %s47, [#allocation7], 128, 128, 8
    $region29: #{tpu_custom_call.1} parent=1 // pred_fallthru
      _
    // Predicated region
    $region30: #{tpu_custom_call.1} parent=1 // pred_check
      _
    $region31: #{tpu_custom_call.1} parent=1 // pred_check_branch
      %54 = sbr.rel (0) target = $region33
    $region32: #{tpu_custom_call.1} parent=1 // pred_region
      _
    $region33: #{tpu_custom_call.1} parent=1 // pred_fallthru
      _
    // Predicated region
    $region34: #{tpu_custom_call.1} parent=1 // pred_check
      _
    $region35: #{tpu_custom_call.1} parent=1 // pred_check_branch
      %56 = sbr.rel (0) target = $region37
    $region36: #{tpu_custom_call.1} parent=1 // pred_region
      _
    $region37: #{tpu_custom_call.1} parent=1 // pred_fallthru
      _
    // Predicated region
    $region38: #{tpu_custom_call.1} parent=1 // pred_check
      _
    $region39: #{tpu_custom_call.1} parent=1 // pred_check_branch
      %58 = sbr.rel (0) target = $region41
    $region40: #{tpu_custom_call.1} parent=1 // pred_region
      _
    $region41: #{tpu_custom_call.1} parent=1 // pred_fallthru
      _
    // Predicated region
    $region42: #{tpu_custom_call.1} parent=1 // pred_check
      _
    $region43: #{tpu_custom_call.1} parent=1 // pred_check_branch
      %60 = sbr.rel (0) target = $region45
    $region44: #{tpu_custom_call.1} parent=1 // pred_region
      %61 = dma.done [#allocation4], 4096
    $region45: #{tpu_custom_call.1} parent=1 // pred_fallthru
      _
    // Predicated region
    $region46: #{tpu_custom_call.1} parent=1 // pred_check
      _
    $region47: #{tpu_custom_call.1} parent=1 // pred_check_branch
      %63 = sbr.rel (0) target = $region49
    $region48: #{tpu_custom_call.1} parent=1 // pred_region
      %64 = dma.done [#allocation7], 4096
    $region49: #{tpu_custom_call.1} parent=1 // pred_fallthru
      _
    %s66 = sld [smem:[#allocation2]]
    %v67 = vld [vmem:[%s1] sm:$0xff]
    %v68 = vpack.c.bf16 %v67, %v67
    %v69 = vld [vmem:[%s2] sm:$0xff]
    %v70 = vld [vmem:[%s2 + $0x8] sm:$0xff]
    %v71 = vld [vmem:[%s2 + $0x10] sm:$0xff]
    %v72 = vld [vmem:[%s2 + $0x18] sm:$0xff]
    %v73 = vld [vmem:[%s3] sm:$0x3]
    %v75 = vlaneseq
    %v76 = vshrl.u32 %v75, 7
    %v77 = vsub.s32 0, %v76
    %v78 = vrot.slane %v73, %v77
    %v79 = vlaneseq
    %v80 = vshrl.u32 %v79, 7
    %v81 = vsub.s32 1, %v80
    %v82 = vrot.slane %v73, %v81
    %v89 = vunpack.c.l.b16 %v69
    %v90 = vunpack.c.h.b16 %v69
    %v91 = vunpack.c.l.b16 %v70
    %v92 = vunpack.c.h.b16 %v70
    %v93 = vunpack.c.l.b16 %v71
    %v94 = vunpack.c.h.b16 %v71
    %v95 = vunpack.c.l.b16 %v72
    %v96 = vunpack.c.h.b16 %v72
    %v97 = vpack.c.b16 %v91, %v89
    %v98 = vpack.c.b16 %v92, %v90
    %v99 = vpack.c.b16 %v95, %v93
    %v100 = vpack.c.b16 %v96, %v94
    %vm105 = vcmask 261120
    %v107 = vsel %vm105, %v68, 0
    %109 = vmatprep.subr.bf16.mxu0 %v98
    %110 = vmatpush1.bf16.msra.mxu0 %v97
    %111 = vmatprep.subr.bf16.mxu0 %v100
    %112 = vmatpush1.bf16.msra.mxu0 %v99
    %113 = vmatprep.subr.bf16.mxu0 0
    %114 = vmatpush1.bf16.msra.mxu0 0
    %115 = vmatprep.subr.bf16.mxu0 0
    %116 = vmatpush1.bf16.msra.mxu0 0
    %117 = vmatprep.subr.bf16.mxu0 0
    %118 = vmatpush1.bf16.msra.mxu0 0
    %119 = vmatprep.subr.bf16.mxu0 0
    %120 = vmatpush1.bf16.msra.mxu0 0
    %121 = vmatprep.subr.bf16.mxu0 0
    %122 = vmatpush1.bf16.msra.mxu0 0
    %123 = vmatprep.subr.bf16.mxu0 0
    %124 = vmatpush1.bf16.msra.mxu0 0
    %125 = vmatprep.subr.bf16.mxu0 0
    %126 = vmatpush1.bf16.msra.mxu0 0
    %127 = vmatprep.subr.bf16.mxu0 0
    %128 = vmatpush1.bf16.msra.mxu0 0
    %129 = vmatprep.subr.bf16.mxu0 0
    %130 = vmatpush1.bf16.msra.mxu0 0
    %131 = vmatprep.subr.bf16.mxu0 0
    %132 = vmatpush1.bf16.msra.mxu0 0
    %133 = vmatprep.subr.bf16.mxu0 0
    %134 = vmatpush1.bf16.msra.mxu0 0
    %135 = vmatprep.subr.bf16.mxu0 0
    %136 = vmatpush1.bf16.msra.mxu0 0
    %137 = vmatprep.subr.bf16.mxu0 0
    %138 = vmatpush1.bf16.msra.mxu0 0
    %139 = vmatprep.subr.bf16.mxu0 0
    %140 = vmatpush1.bf16.msra.mxu0 0
    %141 = vmatprep.mubr.bf16.mxu0 0
    %142 = vmatmul.mubr.bf16.gmra.mrb[0].mxu0 %v107
    %v143 = vpop.f32.mrb[0].mxu0
    %v144 = vadd.f32 %v78, %v143
    %v145 = vpop.f32.mrb[0].mxu0
    %v146 = vadd.f32 %v82, %v145
    %v147 = vpop.f32.mrb[0].mxu0
    %v148 = vpop.f32.mrb[0].mxu0
    %149 = vdwg.mxu0
    %v150 = vmax.f32 %v144, 0.0
    %v151 = vmax.f32 %v146, 0.0
    %v152 = vpack.c.bf16 %v150, %v150
    %v153 = vpack.c.bf16 %v151, %v151
    %v154 = vld [vmem:[#allocation3] sm:$0xff]
    %v155 = vld [vmem:[#allocation3 + $0x8] sm:$0xff]
    %v156 = vld [vmem:[#allocation3 + $0x10] sm:$0xff]
    %v157 = vld [vmem:[#allocation3 + $0x18] sm:$0xff]
    %v158 = vld [vmem:[#allocation3 + $0x20] sm:$0xff]
    %v159 = vld [vmem:[#allocation3 + $0x28] sm:$0xff]
    %v160 = vld [vmem:[#allocation3 + $0x30] sm:$0xff]
    %v161 = vld [vmem:[#allocation3 + $0x38] sm:$0xff]
    %v162 = vld [vmem:[#allocation3 + $0x40] sm:$0xff]
    %v163 = vld [vmem:[#allocation3 + $0x48] sm:$0xff]
    %v164 = vld [vmem:[#allocation3 + $0x50] sm:$0xff]
    %v165 = vld [vmem:[#allocation3 + $0x58] sm:$0xff]
    %v166 = vld [vmem:[#allocation3 + $0x60] sm:$0xff]
    %v167 = vld [vmem:[#allocation3 + $0x68] sm:$0xff]
    %v168 = vld [vmem:[#allocation3 + $0x70] sm:$0xff]
    %v169 = vld [vmem:[#allocation3 + $0x78] sm:$0xff]
    %v170 = vld [vmem:[#allocation3 + $0x80] sm:$0xff]
    %v171 = vld [vmem:[#allocation3 + $0x88] sm:$0xff]
    %v172 = vld [vmem:[#allocation3 + $0x90] sm:$0xff]
    %v173 = vld [vmem:[#allocation3 + $0x98] sm:$0xff]
    %v174 = vld [vmem:[#allocation3 + $0xa0] sm:$0xff]
    %v175 = vld [vmem:[#allocation3 + $0xa8] sm:$0xff]
    %v176 = vld [vmem:[#allocation3 + $0xb0] sm:$0xff]
    %v177 = vld [vmem:[#allocation3 + $0xb8] sm:$0xff]
    %v178 = vld [vmem:[#allocation3 + $0xc0] sm:$0xff]
    %v179 = vld [vmem:[#allocation3 + $0xc8] sm:$0xff]
    %v180 = vld [vmem:[#allocation3 + $0xd0] sm:$0xff]
    %v181 = vld [vmem:[#allocation3 + $0xd8] sm:$0xff]
    %v182 = vld [vmem:[#allocation3 + $0xe0] sm:$0xff]
    %v183 = vld [vmem:[#allocation3 + $0xe8] sm:$0xff]
    %v184 = vld [vmem:[#allocation3 + $0xf0] sm:$0xff]
    %v185 = vld [vmem:[#allocation3 + $0xf8] sm:$0xff]
    %v186 = vld [vmem:[%s5] sm:$0x3]
    %v188 = vlaneseq
    %v189 = vshrl.u32 %v188, 7
    %v190 = vsub.s32 0, %v189
    %v191 = vrot.slane %v186, %v190
    %v192 = vlaneseq
    %v193 = vshrl.u32 %v192, 7
    %v194 = vsub.s32 1, %v193
    %v195 = vrot.slane %v186, %v194
    %v230 = vunpack.c.l.b16 %v154
    %v231 = vunpack.c.h.b16 %v154
    %v232 = vunpack.c.l.b16 %v155
    %v233 = vunpack.c.h.b16 %v155
    %v234 = vunpack.c.l.b16 %v156
    %v235 = vunpack.c.h.b16 %v156
    %v236 = vunpack.c.l.b16 %v157
    %v237 = vunpack.c.h.b16 %v157
    %v238 = vunpack.c.l.b16 %v158
    %v239 = vunpack.c.h.b16 %v158
    %v240 = vunpack.c.l.b16 %v159
    %v241 = vunpack.c.h.b16 %v159
    %v242 = vunpack.c.l.b16 %v160
    %v243 = vunpack.c.h.b16 %v160
    %v244 = vunpack.c.l.b16 %v161
    %v245 = vunpack.c.h.b16 %v161
    %v246 = vunpack.c.l.b16 %v162
    %v247 = vunpack.c.h.b16 %v162
    %v248 = vunpack.c.l.b16 %v163
    %v249 = vunpack.c.h.b16 %v163
    %v250 = vunpack.c.l.b16 %v164
    %v251 = vunpack.c.h.b16 %v164
    %v252 = vunpack.c.l.b16 %v165
    %v253 = vunpack.c.h.b16 %v165
    %v254 = vunpack.c.l.b16 %v166
    %v255 = vunpack.c.h.b16 %v166
    %v256 = vunpack.c.l.b16 %v167
    %v257 = vunpack.c.h.b16 %v167
    %v258 = vunpack.c.l.b16 %v168
    %v259 = vunpack.c.h.b16 %v168
    %v260 = vunpack.c.l.b16 %v169
    %v261 = vunpack.c.h.b16 %v169
    %v262 = vunpack.c.l.b16 %v170
    %v263 = vunpack.c.h.b16 %v170
    %v264 = vunpack.c.l.b16 %v171
    %v265 = vunpack.c.h.b16 %v171
    %v266 = vunpack.c.l.b16 %v172
    %v267 = vunpack.c.h.b16 %v172
    %v268 = vunpack.c.l.b16 %v173
    %v269 = vunpack.c.h.b16 %v173
    %v270 = vunpack.c.l.b16 %v174
    %v271 = vunpack.c.h.b16 %v174
    %v272 = vunpack.c.l.b16 %v175
    %v273 = vunpack.c.h.b16 %v175
    %v274 = vunpack.c.l.b16 %v176
    %v275 = vunpack.c.h.b16 %v176
    %v276 = vunpack.c.l.b16 %v177
    %v277 = vunpack.c.h.b16 %v177
    %v278 = vunpack.c.l.b16 %v178
    %v279 = vunpack.c.h.b16 %v178
    %v280 = vunpack.c.l.b16 %v179
    %v281 = vunpack.c.h.b16 %v179
    %v282 = vunpack.c.l.b16 %v180
    %v283 = vunpack.c.h.b16 %v180
    %v284 = vunpack.c.l.b16 %v181
    %v285 = vunpack.c.h.b16 %v181
    %v286 = vunpack.c.l.b16 %v182
    %v287 = vunpack.c.h.b16 %v182
    %v288 = vunpack.c.l.b16 %v183
    %v289 = vunpack.c.h.b16 %v183
    %v290 = vunpack.c.l.b16 %v184
    %v291 = vunpack.c.h.b16 %v184
    %v292 = vunpack.c.l.b16 %v185
    %v293 = vunpack.c.h.b16 %v185
    %v294 = vpack.c.b16 %v232, %v230
    %v295 = vpack.c.b16 %v233, %v231
    %v296 = vpack.c.b16 %v236, %v234
    %v297 = vpack.c.b16 %v237, %v235
    %v298 = vpack.c.b16 %v240, %v238
    %v299 = vpack.c.b16 %v241, %v239
    %v300 = vpack.c.b16 %v244, %v242
    %v301 = vpack.c.b16 %v245, %v243
    %v302 = vpack.c.b16 %v248, %v246
    %v303 = vpack.c.b16 %v249, %v247
    %v304 = vpack.c.b16 %v252, %v250
    %v305 = vpack.c.b16 %v253, %v251
    %v306 = vpack.c.b16 %v256, %v254
    %v307 = vpack.c.b16 %v257, %v255
    %v308 = vpack.c.b16 %v260, %v258
    %v309 = vpack.c.b16 %v261, %v259
    %v310 = vpack.c.b16 %v264, %v262
    %v311 = vpack.c.b16 %v265, %v263
    %v312 = vpack.c.b16 %v268, %v266
    %v313 = vpack.c.b16 %v269, %v267
    %v314 = vpack.c.b16 %v272, %v270
    %v315 = vpack.c.b16 %v273, %v271
    %v316 = vpack.c.b16 %v276, %v274
    %v317 = vpack.c.b16 %v277, %v275
    %v318 = vpack.c.b16 %v280, %v278
    %v319 = vpack.c.b16 %v281, %v279
    %v320 = vpack.c.b16 %v284, %v282
    %v321 = vpack.c.b16 %v285, %v283
    %v322 = vpack.c.b16 %v288, %v286
    %v323 = vpack.c.b16 %v289, %v287
    %v324 = vpack.c.b16 %v292, %v290
    %v325 = vpack.c.b16 %v293, %v291
    %358 = vmatprep.subr.bf16.mxu0 %v295
    %359 = vmatpush1.bf16.msra.mxu0 %v294
    %360 = vmatprep.subr.bf16.mxu0 %v297
    %361 = vmatpush1.bf16.msra.mxu0 %v296
    %362 = vmatprep.subr.bf16.mxu0 %v299
    %363 = vmatpush1.bf16.msra.mxu0 %v298
    %364 = vmatprep.subr.bf16.mxu0 %v301
    %365 = vmatpush1.bf16.msra.mxu0 %v300
    %366 = vmatprep.subr.bf16.mxu0 %v303
    %367 = vmatpush1.bf16.msra.mxu0 %v302
    %368 = vmatprep.subr.bf16.mxu0 %v305
    %369 = vmatpush1.bf16.msra.mxu0 %v304
    %370 = vmatprep.subr.bf16.mxu0 %v307
    %371 = vmatpush1.bf16.msra.mxu0 %v306
    %372 = vmatprep.subr.bf16.mxu0 %v309
    %373 = vmatpush1.bf16.msra.mxu0 %v308
    %374 = vmatprep.subr.bf16.mxu0 %v311
    %375 = vmatpush1.bf16.msra.mxu0 %v310
    %376 = vmatprep.subr.bf16.mxu0 %v313
    %377 = vmatpush1.bf16.msra.mxu0 %v312
    %378 = vmatprep.subr.bf16.mxu0 %v315
    %379 = vmatpush1.bf16.msra.mxu0 %v314
    %380 = vmatprep.subr.bf16.mxu0 %v317
    %381 = vmatpush1.bf16.msra.mxu0 %v316
    %382 = vmatprep.subr.bf16.mxu0 %v319
    %383 = vmatpush1.bf16.msra.mxu0 %v318
    %384 = vmatprep.subr.bf16.mxu0 %v321
    %385 = vmatpush1.bf16.msra.mxu0 %v320
    %386 = vmatprep.subr.bf16.mxu0 %v323
    %387 = vmatpush1.bf16.msra.mxu0 %v322
    %388 = vmatprep.subr.bf16.mxu0 %v325
    %389 = vmatpush1.bf16.msra.mxu0 %v324
    %390 = vmatprep.mubr.bf16.mxu0 %v153
    %391 = vmatmul.mubr.bf16.gmra.mrb[0].mxu0 %v152
    %v392 = vpop.f32.mrb[0].mxu0
    %v393 = vadd.f32 %v191, %v392
    %v394 = vpop.f32.mrb[0].mxu0
    %v395 = vadd.f32 %v195, %v394
    %v396 = vpop.f32.mrb[0].mxu0
    %v397 = vpop.f32.mrb[0].mxu0
    %398 = vdwg.mxu0
    %v399 = vmax.f32 %v393, 0.0
    %v400 = vmax.f32 %v395, 0.0
    %v401 = vpack.c.bf16 %v399, %v399
    %v402 = vpack.c.bf16 %v400, %v400
    %v403 = vld [vmem:[#allocation6] sm:$0xff]
    %v404 = vld [vmem:[#allocation6 + $0x8] sm:$0xff]
    %v405 = vld [vmem:[#allocation6 + $0x10] sm:$0xff]
    %v406 = vld [vmem:[#allocation6 + $0x18] sm:$0xff]
    %v407 = vld [vmem:[#allocation6 + $0x20] sm:$0xff]
    %v408 = vld [vmem:[#allocation6 + $0x28] sm:$0xff]
    %v409 = vld [vmem:[#allocation6 + $0x30] sm:$0xff]
    %v410 = vld [vmem:[#allocation6 + $0x38] sm:$0xff]
    %v411 = vld [vmem:[#allocation6 + $0x40] sm:$0xff]
    %v412 = vld [vmem:[#allocation6 + $0x48] sm:$0xff]
    %v413 = vld [vmem:[#allocation6 + $0x50] sm:$0xff]
    %v414 = vld [vmem:[#allocation6 + $0x58] sm:$0xff]
    %v415 = vld [vmem:[#allocation6 + $0x60] sm:$0xff]
    %v416 = vld [vmem:[#allocation6 + $0x68] sm:$0xff]
    %v417 = vld [vmem:[#allocation6 + $0x70] sm:$0xff]
    %v418 = vld [vmem:[#allocation6 + $0x78] sm:$0xff]
    %v419 = vld [vmem:[#allocation6 + $0x80] sm:$0xff]
    %v420 = vld [vmem:[#allocation6 + $0x88] sm:$0xff]
    %v421 = vld [vmem:[#allocation6 + $0x90] sm:$0xff]
    %v422 = vld [vmem:[#allocation6 + $0x98] sm:$0xff]
    %v423 = vld [vmem:[#allocation6 + $0xa0] sm:$0xff]
    %v424 = vld [vmem:[#allocation6 + $0xa8] sm:$0xff]
    %v425 = vld [vmem:[#allocation6 + $0xb0] sm:$0xff]
    %v426 = vld [vmem:[#allocation6 + $0xb8] sm:$0xff]
    %v427 = vld [vmem:[#allocation6 + $0xc0] sm:$0xff]
    %v428 = vld [vmem:[#allocation6 + $0xc8] sm:$0xff]
    %v429 = vld [vmem:[#allocation6 + $0xd0] sm:$0xff]
    %v430 = vld [vmem:[#allocation6 + $0xd8] sm:$0xff]
    %v431 = vld [vmem:[#allocation6 + $0xe0] sm:$0xff]
    %v432 = vld [vmem:[#allocation6 + $0xe8] sm:$0xff]
    %v433 = vld [vmem:[#allocation6 + $0xf0] sm:$0xff]
    %v434 = vld [vmem:[#allocation6 + $0xf8] sm:$0xff]
    %v435 = vld [vmem:[%s7] sm:$0x3]
    %v437 = vlaneseq
    %v438 = vshrl.u32 %v437, 7
    %v439 = vsub.s32 0, %v438
    %v440 = vrot.slane %v435, %v439
    %v441 = vlaneseq
    %v442 = vshrl.u32 %v441, 7
    %v443 = vsub.s32 1, %v442
    %v444 = vrot.slane %v435, %v443
    %v479 = vunpack.c.l.b16 %v403
    %v480 = vunpack.c.h.b16 %v403
    %v481 = vunpack.c.l.b16 %v404
    %v482 = vunpack.c.h.b16 %v404
    %v483 = vunpack.c.l.b16 %v405
    %v484 = vunpack.c.h.b16 %v405
    %v485 = vunpack.c.l.b16 %v406
    %v486 = vunpack.c.h.b16 %v406
    %v487 = vunpack.c.l.b16 %v407
    %v488 = vunpack.c.h.b16 %v407
    %v489 = vunpack.c.l.b16 %v408
    %v490 = vunpack.c.h.b16 %v408
    %v491 = vunpack.c.l.b16 %v409
    %v492 = vunpack.c.h.b16 %v409
    %v493 = vunpack.c.l.b16 %v410
    %v494 = vunpack.c.h.b16 %v410
    %v495 = vunpack.c.l.b16 %v411
    %v496 = vunpack.c.h.b16 %v411
    %v497 = vunpack.c.l.b16 %v412
    %v498 = vunpack.c.h.b16 %v412
    %v499 = vunpack.c.l.b16 %v413
    %v500 = vunpack.c.h.b16 %v413
    %v501 = vunpack.c.l.b16 %v414
    %v502 = vunpack.c.h.b16 %v414
    %v503 = vunpack.c.l.b16 %v415
    %v504 = vunpack.c.h.b16 %v415
    %v505 = vunpack.c.l.b16 %v416
    %v506 = vunpack.c.h.b16 %v416
    %v507 = vunpack.c.l.b16 %v417
    %v508 = vunpack.c.h.b16 %v417
    %v509 = vunpack.c.l.b16 %v418
    %v510 = vunpack.c.h.b16 %v418
    %v511 = vunpack.c.l.b16 %v419
    %v512 = vunpack.c.h.b16 %v419
    %v513 = vunpack.c.l.b16 %v420
    %v514 = vunpack.c.h.b16 %v420
    %v515 = vunpack.c.l.b16 %v421
    %v516 = vunpack.c.h.b16 %v421
    %v517 = vunpack.c.l.b16 %v422
    %v518 = vunpack.c.h.b16 %v422
    %v519 = vunpack.c.l.b16 %v423
    %v520 = vunpack.c.h.b16 %v423
    %v521 = vunpack.c.l.b16 %v424
    %v522 = vunpack.c.h.b16 %v424
    %v523 = vunpack.c.l.b16 %v425
    %v524 = vunpack.c.h.b16 %v425
    %v525 = vunpack.c.l.b16 %v426
    %v526 = vunpack.c.h.b16 %v426
    %v527 = vunpack.c.l.b16 %v427
    %v528 = vunpack.c.h.b16 %v427
    %v529 = vunpack.c.l.b16 %v428
    %v530 = vunpack.c.h.b16 %v428
    %v531 = vunpack.c.l.b16 %v429
    %v532 = vunpack.c.h.b16 %v429
    %v533 = vunpack.c.l.b16 %v430
    %v534 = vunpack.c.h.b16 %v430
    %v535 = vunpack.c.l.b16 %v431
    %v536 = vunpack.c.h.b16 %v431
    %v537 = vunpack.c.l.b16 %v432
    %v538 = vunpack.c.h.b16 %v432
    %v539 = vunpack.c.l.b16 %v433
    %v540 = vunpack.c.h.b16 %v433
    %v541 = vunpack.c.l.b16 %v434
    %v542 = vunpack.c.h.b16 %v434
    %v543 = vpack.c.b16 %v481, %v479
    %v544 = vpack.c.b16 %v482, %v480
    %v545 = vpack.c.b16 %v485, %v483
    %v546 = vpack.c.b16 %v486, %v484
    %v547 = vpack.c.b16 %v489, %v487
    %v548 = vpack.c.b16 %v490, %v488
    %v549 = vpack.c.b16 %v493, %v491
    %v550 = vpack.c.b16 %v494, %v492
    %v551 = vpack.c.b16 %v497, %v495
    %v552 = vpack.c.b16 %v498, %v496
    %v553 = vpack.c.b16 %v501, %v499
    %v554 = vpack.c.b16 %v502, %v500
    %v555 = vpack.c.b16 %v505, %v503
    %v556 = vpack.c.b16 %v506, %v504
    %v557 = vpack.c.b16 %v509, %v507
    %v558 = vpack.c.b16 %v510, %v508
    %v559 = vpack.c.b16 %v513, %v511
    %v560 = vpack.c.b16 %v514, %v512
    %v561 = vpack.c.b16 %v517, %v515
    %v562 = vpack.c.b16 %v518, %v516
    %v563 = vpack.c.b16 %v521, %v519
    %v564 = vpack.c.b16 %v522, %v520
    %v565 = vpack.c.b16 %v525, %v523
    %v566 = vpack.c.b16 %v526, %v524
    %v567 = vpack.c.b16 %v529, %v527
    %v568 = vpack.c.b16 %v530, %v528
    %v569 = vpack.c.b16 %v533, %v531
    %v570 = vpack.c.b16 %v534, %v532
    %v571 = vpack.c.b16 %v537, %v535
    %v572 = vpack.c.b16 %v538, %v536
    %v573 = vpack.c.b16 %v541, %v539
    %v574 = vpack.c.b16 %v542, %v540
    %607 = vmatprep.subr.bf16.mxu0 %v544
    %608 = vmatpush1.bf16.msra.mxu0 %v543
    %609 = vmatprep.subr.bf16.mxu0 %v546
    %610 = vmatpush1.bf16.msra.mxu0 %v545
    %611 = vmatprep.subr.bf16.mxu0 %v548
    %612 = vmatpush1.bf16.msra.mxu0 %v547
    %613 = vmatprep.subr.bf16.mxu0 %v550
    %614 = vmatpush1.bf16.msra.mxu0 %v549
    %615 = vmatprep.subr.bf16.mxu0 %v552
    %616 = vmatpush1.bf16.msra.mxu0 %v551
    %617 = vmatprep.subr.bf16.mxu0 %v554
    %618 = vmatpush1.bf16.msra.mxu0 %v553
    %619 = vmatprep.subr.bf16.mxu0 %v556
    %620 = vmatpush1.bf16.msra.mxu0 %v555
    %621 = vmatprep.subr.bf16.mxu0 %v558
    %622 = vmatpush1.bf16.msra.mxu0 %v557
    %623 = vmatprep.subr.bf16.mxu0 %v560
    %624 = vmatpush1.bf16.msra.mxu0 %v559
    %625 = vmatprep.subr.bf16.mxu0 %v562
    %626 = vmatpush1.bf16.msra.mxu0 %v561
    %627 = vmatprep.subr.bf16.mxu0 %v564
    %628 = vmatpush1.bf16.msra.mxu0 %v563
    %629 = vmatprep.subr.bf16.mxu0 %v566
    %630 = vmatpush1.bf16.msra.mxu0 %v565
    %631 = vmatprep.subr.bf16.mxu0 %v568
    %632 = vmatpush1.bf16.msra.mxu0 %v567
    %633 = vmatprep.subr.bf16.mxu0 %v570
    %634 = vmatpush1.bf16.msra.mxu0 %v569
    %635 = vmatprep.subr.bf16.mxu0 %v572
    %636 = vmatpush1.bf16.msra.mxu0 %v571
    %637 = vmatprep.subr.bf16.mxu0 %v574
    %638 = vmatpush1.bf16.msra.mxu0 %v573
    %639 = vmatprep.mubr.bf16.mxu0 %v402
    %640 = vmatmul.mubr.bf16.gmra.mrb[0].mxu0 %v401
    %v641 = vpop.f32.mrb[0].mxu0
    %v642 = vadd.f32 %v440, %v641
    %v643 = vpop.f32.mrb[0].mxu0
    %v644 = vadd.f32 %v444, %v643
    %v645 = vpop.f32.mrb[0].mxu0
    %v646 = vpop.f32.mrb[0].mxu0
    %647 = vdwg.mxu0
    %v648 = vmax.f32 %v642, 0.0
    %v649 = vmax.f32 %v644, 0.0
    %v650 = vpack.c.bf16 %v648, %v648
    %v651 = vpack.c.bf16 %v649, %v649
    %v652 = vld [vmem:[%s8] sm:$0xf]
    %v653 = vld [vmem:[%s8 + $0x4] sm:$0xf]
    %v654 = vld [vmem:[%s8 + $0x8] sm:$0xf]
    %v655 = vld [vmem:[%s8 + $0xc] sm:$0xf]
    %v656 = vld [vmem:[%s8 + $0x10] sm:$0xf]
    %v657 = vld [vmem:[%s8 + $0x14] sm:$0xf]
    %v658 = vld [vmem:[%s8 + $0x18] sm:$0xf]
    %v659 = vld [vmem:[%s8 + $0x1c] sm:$0xf]
    %v660 = vld [vmem:[%s8 + $0x20] sm:$0xf]
    %v661 = vld [vmem:[%s8 + $0x24] sm:$0xf]
    %v662 = vld [vmem:[%s8 + $0x28] sm:$0xf]
    %v663 = vld [vmem:[%s8 + $0x2c] sm:$0xf]
    %v664 = vld [vmem:[%s8 + $0x30] sm:$0xf]
    %v665 = vld [vmem:[%s8 + $0x34] sm:$0xf]
    %v666 = vld [vmem:[%s8 + $0x38] sm:$0xf]
    %v667 = vld [vmem:[%s8 + $0x3c] sm:$0xf]
    %v668 = vld [vmem:[%s8 + $0x40] sm:$0xf]
    %v669 = vld [vmem:[%s8 + $0x44] sm:$0xf]
    %v670 = vld [vmem:[%s8 + $0x48] sm:$0xf]
    %v671 = vld [vmem:[%s8 + $0x4c] sm:$0xf]
    %v672 = vld [vmem:[%s8 + $0x50] sm:$0xf]
    %v673 = vld [vmem:[%s8 + $0x54] sm:$0xf]
    %v674 = vld [vmem:[%s8 + $0x58] sm:$0xf]
    %v675 = vld [vmem:[%s8 + $0x5c] sm:$0xf]
    %v676 = vld [vmem:[%s8 + $0x60] sm:$0xf]
    %v677 = vld [vmem:[%s8 + $0x64] sm:$0xf]
    %v678 = vld [vmem:[%s8 + $0x68] sm:$0xf]
    %v679 = vld [vmem:[%s8 + $0x6c] sm:$0xf]
    %v680 = vld [vmem:[%s8 + $0x70] sm:$0xf]
    %v681 = vld [vmem:[%s8 + $0x74] sm:$0xf]
    %v682 = vld [vmem:[%s8 + $0x78] sm:$0xf]
    %v683 = vld [vmem:[%s8 + $0x7c] sm:$0xf]
    %v684 = vld [vmem:[%s9] sm:$0x1]
    %v686 = vlaneseq
    %v687 = vshrl.u32 %v686, 7
    %v688 = vsub.s32 0, %v687
    %v689 = vrot.slane %v684, %v688
    %v723 = vunpack.c.l.b16 %v652
    %v724 = vunpack.c.l.b16 %v653
    %v725 = vunpack.c.l.b16 %v654
    %v726 = vunpack.c.l.b16 %v655
    %v727 = vunpack.c.l.b16 %v656
    %v728 = vunpack.c.l.b16 %v657
    %v729 = vunpack.c.l.b16 %v658
    %v730 = vunpack.c.l.b16 %v659
    %v731 = vunpack.c.l.b16 %v660
    %v732 = vunpack.c.l.b16 %v661
    %v733 = vunpack.c.l.b16 %v662
    %v734 = vunpack.c.l.b16 %v663
    %v735 = vunpack.c.l.b16 %v664
    %v736 = vunpack.c.l.b16 %v665
    %v737 = vunpack.c.l.b16 %v666
    %v738 = vunpack.c.l.b16 %v667
    %v739 = vunpack.c.l.b16 %v668
    %v740 = vunpack.c.l.b16 %v669
    %v741 = vunpack.c.l.b16 %v670
    %v742 = vunpack.c.l.b16 %v671
    %v743 = vunpack.c.l.b16 %v672
    %v744 = vunpack.c.l.b16 %v673
    %v745 = vunpack.c.l.b16 %v674
    %v746 = vunpack.c.l.b16 %v675
    %v747 = vunpack.c.l.b16 %v676
    %v748 = vunpack.c.l.b16 %v677
    %v749 = vunpack.c.l.b16 %v678
    %v750 = vunpack.c.l.b16 %v679
    %v751 = vunpack.c.l.b16 %v680
    %v752 = vunpack.c.l.b16 %v681
    %v753 = vunpack.c.l.b16 %v682
    %v754 = vunpack.c.l.b16 %v683
    %v755 = vpack.c.b16 %v724, %v723
    %v756 = vpack.c.b16 %v726, %v725
    %v757 = vpack.c.b16 %v728, %v727
    %v758 = vpack.c.b16 %v730, %v729
    %v759 = vpack.c.b16 %v732, %v731
    %v760 = vpack.c.b16 %v734, %v733
    %v761 = vpack.c.b16 %v736, %v735
    %v762 = vpack.c.b16 %v738, %v737
    %v763 = vpack.c.b16 %v740, %v739
    %v764 = vpack.c.b16 %v742, %v741
    %v765 = vpack.c.b16 %v744, %v743
    %v766 = vpack.c.b16 %v746, %v745
    %v767 = vpack.c.b16 %v748, %v747
    %v768 = vpack.c.b16 %v750, %v749
    %v769 = vpack.c.b16 %v752, %v751
    %v770 = vpack.c.b16 %v754, %v753
    %787 = vmatprep.subr.bf16.mxu0 0
    %788 = vmatpush1.bf16.msra.mxu0 %v755
    %789 = vmatprep.subr.bf16.mxu0 0
    %790 = vmatpush1.bf16.msra.mxu0 %v756
    %791 = vmatprep.subr.bf16.mxu0 0
    %792 = vmatpush1.bf16.msra.mxu0 %v757
    %793 = vmatprep.subr.bf16.mxu0 0
    %794 = vmatpush1.bf16.msra.mxu0 %v758
    %795 = vmatprep.subr.bf16.mxu0 0
    %796 = vmatpush1.bf16.msra.mxu0 %v759
    %797 = vmatprep.subr.bf16.mxu0 0
    %798 = vmatpush1.bf16.msra.mxu0 %v760
    %799 = vmatprep.subr.bf16.mxu0 0
    %800 = vmatpush1.bf16.msra.mxu0 %v761
    %801 = vmatprep.subr.bf16.mxu0 0
    %802 = vmatpush1.bf16.msra.mxu0 %v762
    %803 = vmatprep.subr.bf16.mxu0 0
    %804 = vmatpush1.bf16.msra.mxu0 %v763
    %805 = vmatprep.subr.bf16.mxu0 0
    %806 = vmatpush1.bf16.msra.mxu0 %v764
    %807 = vmatprep.subr.bf16.mxu0 0
    %808 = vmatpush1.bf16.msra.mxu0 %v765
    %809 = vmatprep.subr.bf16.mxu0 0
    %810 = vmatpush1.bf16.msra.mxu0 %v766
    %811 = vmatprep.subr.bf16.mxu0 0
    %812 = vmatpush1.bf16.msra.mxu0 %v767
    %813 = vmatprep.subr.bf16.mxu0 0
    %814 = vmatpush1.bf16.msra.mxu0 %v768
    %815 = vmatprep.subr.bf16.mxu0 0
    %816 = vmatpush1.bf16.msra.mxu0 %v769
    %817 = vmatprep.subr.bf16.mxu0 0
    %818 = vmatpush1.bf16.msra.mxu0 %v770
    %819 = vmatprep.mubr.bf16.mxu0 %v651
    %820 = vmatmul.mubr.bf16.gmra.mrb[0].mxu0 %v650
    %v821 = vpop.f32.mrb[0].mxu0
    %v822 = vadd.f32 %v689, %v821
    %v823 = vpop.f32.mrb[0].mxu0
    %v824 = vpop.f32.mrb[0].mxu0
    %v825 = vpop.f32.mrb[0].mxu0
    %826 = vdwg.mxu0
    %v827 = vtanh.pop %v822
    %v828 = vstv %s66
    %v829 = vmul.f32 %v828, %v827
    %vm830 = vcmask 64512
    %831 = vst.msk [vmem:[#allocation8] sm:$0xff] %vm830, %v829
    // Predicated region
    $region50: #{tpu_custom_call.1} parent=1 // pred_check
      _
    $region51: #{tpu_custom_call.1} parent=1 // pred_check_branch
      %833 = sbr.rel (0) target = $region53
    $region52: #{tpu_custom_call.1} parent=1 // pred_region
      %s835 = ssub.s32 128, 128
      %836 = vsyncadd [#allocation5], %s835
      %s838 = sshll.u32 [#allocation8], 4
      %s839 = int_to_ptr.vmem [resolvable:$true] %s838
      %841 = dma.vmem_to_hbm [thread:$0]  %s839, 128, %s10, [#allocation5]
    $region53: #{tpu_custom_call.1} parent=1 // pred_fallthru
      _
    // Predicated region
    $region54: #{tpu_custom_call.1} parent=1 // pred_check
      _
    $region55: #{tpu_custom_call.1} parent=1 // pred_check_branch
      %843 = sbr.rel (0) target = $region57
    $region56: #{tpu_custom_call.1} parent=1 // pred_region
      %844 = dma.done [#allocation5], 128
    $region57: #{tpu_custom_call.1} parent=1 // pred_fallthru
      _
    %845 = vsyncpa [#allocation4], 1
    %846 = vsyncpa [#allocation7], 1
    %847 = vsyncpa [#allocation5], 1

</llo_original>
